<compile_context>
chip_gen: v7x
topology: tpu7x:2x2x1
jax: 0.10.0
libtpu: 0.0.40
codegen_flags: <defaults>
</compile_context>

<pallas_src>
import functools
import math

import jax
import jax.numpy as jnp
from jax.experimental import pallas as pl
from jax.experimental.pallas import tpu as pltpu


def _round_up(v, m):
    return ((v + m - 1) // m) * m


# ----------------------------------------------------------------------------
# Fused Pallas kernel: grid=(L,), activation resident in the output block.
# ----------------------------------------------------------------------------
def diffmlp_fused_kernel(x_ref, mod_ref, w1a_ref, w1b_ref, w2a_ref, w2b_ref,
                         b_ref, out_ref, *, inv_d):
    l = pl.program_id(0)

    @pl.when(l == 0)
    def _():
        out_ref[...] = x_ref[...]

    x = out_ref[...]                          # (Bp, Dp) f32, resident accumulator
    dp = x.shape[-1]
    mp = w1a_ref.shape[-1]

    m = mod_ref[...][0]                       # (6, Bp, Dp) precomputed adaLN mods
    shift1, scale1, gate1 = m[0], m[1], m[2]
    shift2, scale2, gate2 = m[3], m[4], m[5]

    bias = b_ref[...][0]                      # (4, max(Mp, Dp)) f32
    ba1, bb1 = bias[0, :mp], bias[1, :dp]
    ba2, bb2 = bias[2, :mp], bias[3, :dp]

    def layer_norm(v):
        # One-pass masked LN: padded lanes are zero so sums only see the real D
        # columns; divide by the real D (inv_d).  eps=1e-6, no affine.
        mu = jnp.sum(v, axis=-1, keepdims=True) * inv_d
        ex2 = jnp.sum(v * v, axis=-1, keepdims=True) * inv_d
        var = ex2 - mu * mu
        return (v - mu) * jax.lax.rsqrt(var + 1e-6)

    def mlp(v, wa_ref, wb_ref, ba, bb):
        # Linear -> ReLU -> (BatchNorm1d folded into second Linear) -> Linear.
        # TODO(synk): Dropout(0.1) / training-mode BN batch statistics are
        # inference-mode identity here (deterministic kernel).
        h = jnp.dot(v.astype(jnp.bfloat16), wa_ref[0],
                    preferred_element_type=jnp.float32) + ba
        h = jnp.maximum(h, 0.0)
        return jnp.dot(h.astype(jnp.bfloat16), wb_ref[0],
                       preferred_element_type=jnp.float32) + bb

    # block-internal residual #1
    y = x + gate1 * mlp(layer_norm(x) * (1.0 + scale1) + shift1,
                        w1a_ref, w1b_ref, ba1, bb1)
    # block-internal residual #2
    y = y + gate2 * mlp(layer_norm(y) * (1.0 + scale2) + shift2,
                        w2a_ref, w2b_ref, ba2, bb2)

    # outer DiffMLP residual: x_{l+1} = x_l + block(x_l, c)
    out_ref[...] = x + y


def run_diffmlp_fused(x_p, mods, p, d_real):
    """All layers of DiffMLP in one pallas_call (grid over layers)."""
    Bp, Dp = x_p.shape
    L = p["w1a"].shape[0]
    Mp = p["w1a"].shape[-1]

    resident = pl.BlockSpec((Bp, Dp), lambda l: (0, 0))

    def per_layer(a):
        nd = a.ndim
        return pl.BlockSpec((1,) + tuple(a.shape[1:]),
                            lambda l, _n=nd: (l,) + (0,) * (_n - 1))

    args = (x_p, mods, p["w1a"], p["w1b"], p["w2a"], p["w2b"], p["bias"])
    in_specs = [resident, per_layer(mods)] + [per_layer(a) for a in args[2:]]

    # VMEM footprint: residents + double-buffered per-layer inputs (+ headroom).
    per_layer_bytes = sum(int(a.size // a.shape[0]) * a.dtype.itemsize
                          for a in args[1:])
    footprint = 2 * Bp * Dp * 4 + 2 * per_layer_bytes
    vmem_limit = int(min(max(footprint + (8 << 20), 16 << 20), 100 << 20))

    flops = 8 * Bp * Dp * Mp * L                       # 4 MXU dots per layer
    bytes_accessed = per_layer_bytes * L + 2 * Bp * Dp * 4
    cost = pl.CostEstimate(flops=flops, transcendentals=2 * Bp * L,
                           bytes_accessed=bytes_accessed)

    kernel = functools.partial(diffmlp_fused_kernel, inv_d=1.0 / d_real)
    return pl.pallas_call(
        kernel,
        out_shape=jax.ShapeDtypeStruct((Bp, Dp), jnp.float32),
        grid=(L,),
        in_specs=in_specs,
        out_specs=resident,
        cost_estimate=cost,
        compiler_params=pltpu.CompilerParams(
            dimension_semantics=("arbitrary",),        # layers are sequential
            vmem_limit_bytes=vmem_limit),
    )(*args)


# ----------------------------------------------------------------------------
# Timestep embedder (small glue compute, plain JAX).
# ----------------------------------------------------------------------------
FREQ_DIM = 256


def timestep_embedding(t_cont, dim=FREQ_DIM, max_period=10000.0):
    half = dim // 2
    freqs = jnp.exp(
        -math.log(max_period) * jnp.arange(half, dtype=jnp.float32) / half)
    angles = t_cont[:, None].astype(jnp.float32) * freqs[None, :]
    return jnp.concatenate([jnp.cos(angles), jnp.sin(angles)], axis=-1)


def timestep_embedder_apply(t_cont, te_params):
    h = timestep_embedding(t_cont)
    h = h @ te_params["w1"] + te_params["b1"]
    h = h * jax.nn.sigmoid(h)  # SiLU
    return h @ te_params["w2"] + te_params["b2"]


# ----------------------------------------------------------------------------
# Parameter construction (deterministic synthetic init; the reference
# weights_init is approximated by a fixed-seed normal init).
# ----------------------------------------------------------------------------
def init_block_params(key, D, M):
    keys = jax.random.split(key, 5)
    s = 0.02
    bn = (jnp.ones((M,), jnp.float32),     # gamma
          jnp.zeros((M,), jnp.float32),    # beta
          jnp.zeros((M,), jnp.float32),    # running_mean
          jnp.ones((M,), jnp.float32))     # running_var
    return {
        "wmod": s * jax.random.normal(keys[0], (D, 6 * D), jnp.float32),
        "bmod": jnp.zeros((6 * D,), jnp.float32),
        "w1a": s * jax.random.normal(keys[1], (D, M), jnp.float32),
        "b1a": jnp.zeros((M,), jnp.float32),
        "bn1": bn,
        "w1b": s * jax.random.normal(keys[2], (M, D), jnp.float32),
        "b1b": jnp.zeros((D,), jnp.float32),
        "w2a": s * jax.random.normal(keys[3], (D, M), jnp.float32),
        "b2a": jnp.zeros((M,), jnp.float32),
        "bn2": bn,
        "w2b": s * jax.random.normal(keys[4], (M, D), jnp.float32),
        "b2b": jnp.zeros((D,), jnp.float32),
    }


def init_timestep_embedder_params(key, out_dim):
    k1, k2 = jax.random.split(key)
    s = 0.02
    return {
        "w1": s * jax.random.normal(k1, (FREQ_DIM, out_dim), jnp.float32),
        "b1": jnp.zeros((out_dim,), jnp.float32),
        "w2": s * jax.random.normal(k2, (out_dim, out_dim), jnp.float32),
        "b2": jnp.zeros((out_dim,), jnp.float32),
    }


def _fold_bn(bn, eps=1e-5):
    gamma, beta, rmean, rvar = bn
    scale = gamma / jnp.sqrt(rvar + eps)
    bias = beta - rmean * scale
    return scale, bias


def pack_params(block_params_list, D, M, Dp, Mp, weight_dtype=jnp.bfloat16):
    """Kernel-friendly layout: padded to (Dp, Mp), BN folded, biases packed."""
    max_b = max(Mp, Dp)
    out = {k: [] for k in ("wmod", "bmod", "w1a", "w1b", "w2a", "w2b", "bias")}

    def pad2(a, r, c):
        return jnp.pad(a, ((0, r - a.shape[0]), (0, c - a.shape[1])))

    def pad1(a, n):
        return jnp.pad(a, ((0, n - a.shape[0]),))

    for bp in block_params_list:
        # adaLN weight (D, 6D) -> (6, Dp, Dp); chunk k == original cols kD:(k+1)D.
        wmod = jnp.transpose(bp["wmod"].reshape(D, 6, D), (1, 0, 2))
        out["wmod"].append(jnp.stack([pad2(wmod[k], Dp, Dp) for k in range(6)]))
        out["bmod"].append(jnp.stack(
            [pad1(bp["bmod"].reshape(6, D)[k], Dp) for k in range(6)]))

        biases = []
        for tag in ("1", "2"):
            s, b = _fold_bn(bp["bn" + tag])
            wa = bp["w%sa" % tag]
            ba = bp["b%sa" % tag]
            wb = bp["w%sb" % tag] * s[:, None]                 # exact BN fold
            bbv = b @ bp["w%sb" % tag] + bp["b%sb" % tag]      # exact BN fold
            out["w%sa" % tag].append(pad2(wa, Dp, Mp).astype(weight_dtype))
            out["w%sb" % tag].append(pad2(wb, Mp, Dp).astype(weight_dtype))
            biases.append(pad1(ba, max_b))
            biases.append(pad1(bbv, max_b))
        out["bias"].append(jnp.stack(biases))                  # (4, max_b) f32
    return {k: jnp.stack(v, axis=0) for k, v in out.items()}


def precompute_modulation(c_p, wmod, bmod):
    """(Bp,Dp) x (L,6,Dp,Dp) -> (L,6,Bp,Dp): all layers' shift/scale/gate."""
    silu_c = c_p * jax.nn.sigmoid(c_p)
    return jnp.einsum('bd,lkde->lkbe', silu_c, wmod) + bmod[:, :, None, :]


# ----------------------------------------------------------------------------
# DiffMLP forward: one fused pallas_call over all layers.
# ----------------------------------------------------------------------------
def diffmlp_forward(x, t_idx, c_unused, t_list, te_params, packed, D, Dp):
    del c_unused  # matches reference: `c` argument is ignored in forward
    B = x.shape[0]
    Bp = _round_up(max(B, 8), 8)
    t_cont = t_list[t_idx]                               # (B,)
    t_emb = timestep_embedder_apply(t_cont, te_params)   # (B, D)
    x_p = jnp.zeros((Bp, Dp), jnp.float32).at[:B, :D].set(x)
    c_p = jnp.zeros((Bp, Dp), jnp.float32).at[:B, :D].set(t_emb)
    mods = precompute_modulation(c_p, packed["wmod"], packed["bmod"])
    out = run_diffmlp_fused(x_p, mods, packed, float(D))
    return out[:B, :D]


# ----------------------------------------------------------------------------
# Pure-JAX reference (f32, unpadded, BN applied explicitly) for verification.
# ----------------------------------------------------------------------------
def diffmlp_reference(x, t_idx, t_list, te_params, blocks):
    c = timestep_embedder_apply(t_list[t_idx], te_params)
    silu_c = c * jax.nn.sigmoid(c)

    def ln(v):
        mu = jnp.mean(v, -1, keepdims=True)
        var = jnp.mean((v - mu) ** 2, -1, keepdims=True)
        return (v - mu) / jnp.sqrt(var + 1e-6)

    for bp in blocks:
        mods = silu_c @ bp["wmod"] + bp["bmod"]
        sh1, sc1, g1, sh2, sc2, g2 = jnp.split(mods, 6, axis=1)

        def mlp(v, tag, bp=bp):
            h = v @ bp["w%sa" % tag] + bp["b%sa" % tag]
            h = jnp.maximum(h, 0.0)
            gamma, beta, rmean, rvar = bp["bn" + tag]
            h = (h - rmean) / jnp.sqrt(rvar + 1e-5) * gamma + beta
            return h @ bp["w%sb" % tag] + bp["b%sb" % tag]

        y = x + g1 * mlp(ln(x) * (1 + sc1) + sh1, "1")
        y = y + g2 * mlp(ln(y) * (1 + sc2) + sh2, "2")
        x = x + y
    return x


if __name__ == "__main__":
    hidden_size = 32
    num_layers = 2
    mlp_ratio = 2.0
    D = hidden_size * 2              # block internal width
    M = int(D * mlp_ratio)           # MLP hidden dim
    Dp = _round_up(D, 128)           # lane-dense padding
    Mp = _round_up(M, 128)
    B = 8

    key = jax.random.PRNGKey(0)
    kx, kt, kc, kte, kb = jax.random.split(key, 5)

    x = jax.random.normal(kx, (B, D), jnp.float32)
    t_idx = jax.random.randint(kt, (B,), 0, 500)            # indices into t_list
    c = jax.random.normal(kc, (B, D), jnp.float32)          # ignored by forward
    t_list = jnp.linspace(0.01, 5.0, 500, dtype=jnp.float32)

    te_params = init_timestep_embedder_params(kte, D)
    block_keys = jax.random.split(kb, num_layers)
    block_params_list = [init_block_params(block_keys[i], D, M)
                         for i in range(num_layers)]
    packed = pack_params(block_params_list, D, M, Dp, Mp)

    fwd = jax.jit(functools.partial(diffmlp_forward, D=D, Dp=Dp))
    out = fwd(x, t_idx, c, t_list, te_params, packed)
    jax.block_until_ready(out)

    assert out.shape == (B, D) and out.dtype == jnp.float32
    assert bool(jnp.all(jnp.isfinite(out)))

    ref = diffmlp_reference(x, t_idx, t_list, te_params, block_params_list)
    err = float(jnp.max(jnp.abs(out - ref)))
    assert err < 5e-2, "max abs err vs reference: %g" % err

    print("KERNEL_OK")
</pallas_src>

<mosaic_0001>
module attributes {stable_mosaic.version = 11 : i64} {
  func.func @diffmlp_fused_kernel(%arg0: i32, %arg1: memref<8x128xf32, #tpu.memory_space<vmem>>, %arg2: memref<1x6x8x128xf32, #tpu.memory_space<vmem>>, %arg3: memref<1x128x128xbf16, #tpu.memory_space<vmem>>, %arg4: memref<1x128x128xbf16, #tpu.memory_space<vmem>>, %arg5: memref<1x128x128xbf16, #tpu.memory_space<vmem>>, %arg6: memref<1x128x128xbf16, #tpu.memory_space<vmem>>, %arg7: memref<1x4x128xf32, #tpu.memory_space<vmem>>, %arg8: memref<8x128xf32, #tpu.memory_space<vmem>>) attributes {dimension_semantics = [#tpu.dimension_semantics<arbitrary>], iteration_bounds = array<i64: 2>, scalar_prefetch = 0 : i64, scratch_operands = 0 : i64, tpu.core_type = #tpu.core_type<tc>, window_params = [{pipeline_mode = #tpu.pipeline_mode<synchronous>, transform_indices = @transform_0, window_bounds = array<i64: 8, 128>}, {transform_indices = @transform_1, window_bounds = array<i64: 1, 6, 8, 128>}, {transform_indices = @transform_2, window_bounds = array<i64: 1, 128, 128>}, {transform_indices = @transform_3, window_bounds = array<i64: 1, 128, 128>}, {transform_indices = @transform_4, window_bounds = array<i64: 1, 128, 128>}, {transform_indices = @transform_5, window_bounds = array<i64: 1, 128, 128>}, {transform_indices = @transform_6, window_bounds = array<i64: 1, 4, 128>}, {pipeline_mode = #tpu.pipeline_mode<synchronous>, transform_indices = @transform_7, window_bounds = array<i64: 8, 128>}]} {
    %c0_i32 = arith.constant 0 : i32
    %0 = arith.cmpi eq, %arg0, %c0_i32 : i32
    %1 = arith.extui %0 : i1 to i32
    %c0_i32_0 = arith.constant 0 : i32
    %2 = arith.cmpi ne, %1, %c0_i32_0 : i32
    scf.if %2 {
      %c0_40 = arith.constant 0 : index
      %c0_41 = arith.constant 0 : index
      %110 = vector.load %arg1[%c0_40, %c0_41] : memref<8x128xf32, #tpu.memory_space<vmem>>, vector<8x128xf32>
      %c0_42 = arith.constant 0 : index
      %c0_43 = arith.constant 0 : index
      %111 = vector.load %arg8[%c0_42, %c0_43] : memref<8x128xf32, #tpu.memory_space<vmem>>, vector<8x128xf32>
      tpu.vector_store %arg8[%c0_42, %c0_43], %110 {strides = array<i32>} : memref<8x128xf32, #tpu.memory_space<vmem>>, vector<8x128xf32>,
    } else {
    }
    %c0 = arith.constant 0 : index
    %c0_1 = arith.constant 0 : index
    %3 = vector.load %arg8[%c0, %c0_1] : memref<8x128xf32, #tpu.memory_space<vmem>>, vector<8x128xf32>
    %c0_2 = arith.constant 0 : index
    %c0_3 = arith.constant 0 : index
    %c0_4 = arith.constant 0 : index
    %c0_5 = arith.constant 0 : index
    %4 = vector.load %arg2[%c0_2, %c0_3, %c0_4, %c0_5] : memref<1x6x8x128xf32, #tpu.memory_space<vmem>>, vector<1x6x8x128xf32>
    %5 = vector.shape_cast %4 : vector<1x6x8x128xf32> to vector<6x8x128xf32>
    %6 = vector.extract_strided_slice %5 {offsets = [0, 0, 0], sizes = [1, 8, 128], strides = [1, 1, 1]} : vector<6x8x128xf32> to vector<1x8x128xf32>
    %7 = vector.shape_cast %6 : vector<1x8x128xf32> to vector<8x128xf32>
    %8 = vector.extract_strided_slice %5 {offsets = [1, 0, 0], sizes = [1, 8, 128], strides = [1, 1, 1]} : vector<6x8x128xf32> to vector<1x8x128xf32>
    %9 = vector.shape_cast %8 : vector<1x8x128xf32> to vector<8x128xf32>
    %10 = vector.extract_strided_slice %5 {offsets = [2, 0, 0], sizes = [1, 8, 128], strides = [1, 1, 1]} : vector<6x8x128xf32> to vector<1x8x128xf32>
    %11 = vector.shape_cast %10 : vector<1x8x128xf32> to vector<8x128xf32>
    %12 = vector.extract_strided_slice %5 {offsets = [3, 0, 0], sizes = [1, 8, 128], strides = [1, 1, 1]} : vector<6x8x128xf32> to vector<1x8x128xf32>
    %13 = vector.shape_cast %12 : vector<1x8x128xf32> to vector<8x128xf32>
    %14 = vector.extract_strided_slice %5 {offsets = [4, 0, 0], sizes = [1, 8, 128], strides = [1, 1, 1]} : vector<6x8x128xf32> to vector<1x8x128xf32>
    %15 = vector.shape_cast %14 : vector<1x8x128xf32> to vector<8x128xf32>
    %16 = vector.extract_strided_slice %5 {offsets = [5, 0, 0], sizes = [1, 8, 128], strides = [1, 1, 1]} : vector<6x8x128xf32> to vector<1x8x128xf32>
    %17 = vector.shape_cast %16 : vector<1x8x128xf32> to vector<8x128xf32>
    %c0_6 = arith.constant 0 : index
    %c0_7 = arith.constant 0 : index
    %c0_8 = arith.constant 0 : index
    %18 = vector.load %arg7[%c0_6, %c0_7, %c0_8] : memref<1x4x128xf32, #tpu.memory_space<vmem>>, vector<1x4x128xf32>
    %19 = vector.shape_cast %18 : vector<1x4x128xf32> to vector<4x128xf32>
    %20 = vector.extract_strided_slice %19 {offsets = [0, 0], sizes = [1, 128], strides = [1, 1]} : vector<4x128xf32> to vector<1x128xf32>
    %21 = vector.shape_cast %20 : vector<1x128xf32> to vector<128xf32>
    %22 = vector.extract_strided_slice %19 {offsets = [1, 0], sizes = [1, 128], strides = [1, 1]} : vector<4x128xf32> to vector<1x128xf32>
    %23 = vector.shape_cast %22 : vector<1x128xf32> to vector<128xf32>
    %24 = vector.extract_strided_slice %19 {offsets = [2, 0], sizes = [1, 128], strides = [1, 1]} : vector<4x128xf32> to vector<1x128xf32>
    %25 = vector.shape_cast %24 : vector<1x128xf32> to vector<128xf32>
    %26 = vector.extract_strided_slice %19 {offsets = [3, 0], sizes = [1, 128], strides = [1, 1]} : vector<4x128xf32> to vector<1x128xf32>
    %27 = vector.shape_cast %26 : vector<1x128xf32> to vector<128xf32>
    %cst = arith.constant dense<0.000000e+00> : vector<8xf32>
    %28 = vector.multi_reduction <add>, %3, %cst [1] : vector<8x128xf32> to vector<8xf32>
    %29 = vector.shape_cast %28 : vector<8xf32> to vector<8x1xf32>
    %cst_9 = arith.constant 1.562500e-02 : f32
    %30 = vector.broadcast %cst_9 : f32 to vector<8x1xf32>
    %31 = arith.mulf %29, %30 : vector<8x1xf32>
    %32 = arith.mulf %3, %3 : vector<8x128xf32>
    %cst_10 = arith.constant dense<0.000000e+00> : vector<8xf32>
    %33 = vector.multi_reduction <add>, %32, %cst_10 [1] : vector<8x128xf32> to vector<8xf32>
    %34 = vector.shape_cast %33 : vector<8xf32> to vector<8x1xf32>
    %cst_11 = arith.constant 1.562500e-02 : f32
    %35 = vector.broadcast %cst_11 : f32 to vector<8x1xf32>
    %36 = arith.mulf %34, %35 : vector<8x1xf32>
    %37 = arith.mulf %31, %31 : vector<8x1xf32>
    %38 = arith.subf %36, %37 : vector<8x1xf32>
    %39 = vector.broadcast %31 : vector<8x1xf32> to vector<8x128xf32>
    %40 = arith.subf %3, %39 : vector<8x128xf32>
    %cst_12 = arith.constant 9.99999997E-7 : f32
    %41 = vector.broadcast %cst_12 : f32 to vector<8x1xf32>
    %42 = arith.addf %38, %41 : vector<8x1xf32>
    %43 = math.rsqrt %42 : vector<8x1xf32>
    %44 = vector.broadcast %43 : vector<8x1xf32> to vector<8x128xf32>
    %45 = arith.mulf %40, %44 : vector<8x128xf32>
    %cst_13 = arith.constant 1.000000e+00 : f32
    %46 = vector.broadcast %cst_13 : f32 to vector<8x128xf32>
    %47 = arith.addf %46, %9 : vector<8x128xf32>
    %48 = arith.mulf %45, %47 : vector<8x128xf32>
    %49 = arith.addf %48, %7 : vector<8x128xf32>
    %50 = arith.truncf %49 : vector<8x128xf32> to vector<8x128xbf16>
    %c0_14 = arith.constant 0 : index
    %c0_15 = arith.constant 0 : index
    %c0_16 = arith.constant 0 : index
    %51 = vector.load %arg3[%c0_14, %c0_15, %c0_16] : memref<1x128x128xbf16, #tpu.memory_space<vmem>>, vector<1x128x128xbf16>
    %52 = vector.shape_cast %51 : vector<1x128x128xbf16> to vector<128x128xbf16>
    %cst_17 = arith.constant dense<0.000000e+00> : vector<8x128xf32>
    %53 = tpu.matmul %50, %52, %cst_17 {dimension_numbers = #tpu.dot_dimension_numbers<[1], [0], [0], [1], [0, 0, 1, 1], [], []>} : vector<8x128xbf16>, vector<128x128xbf16>, vector<8x128xf32> -> vector<8x128xf32>
    %54 = vector.shape_cast %21 : vector<128xf32> to vector<1x128xf32>
    %55 = vector.broadcast %54 : vector<1x128xf32> to vector<8x128xf32>
    %56 = arith.addf %53, %55 : vector<8x128xf32>
    %cst_18 = arith.constant 0.000000e+00 : f32
    %57 = vector.broadcast %cst_18 : f32 to vector<8x128xf32>
    %58 = arith.maximumf %56, %57 : vector<8x128xf32>
    %59 = arith.truncf %58 : vector<8x128xf32> to vector<8x128xbf16>
    %c0_19 = arith.constant 0 : index
    %c0_20 = arith.constant 0 : index
    %c0_21 = arith.constant 0 : index
    %60 = vector.load %arg4[%c0_19, %c0_20, %c0_21] : memref<1x128x128xbf16, #tpu.memory_space<vmem>>, vector<1x128x128xbf16>
    %61 = vector.shape_cast %60 : vector<1x128x128xbf16> to vector<128x128xbf16>
    %cst_22 = arith.constant dense<0.000000e+00> : vector<8x128xf32>
    %62 = tpu.matmul %59, %61, %cst_22 {dimension_numbers = #tpu.dot_dimension_numbers<[1], [0], [0], [1], [0, 0, 1, 1], [], []>} : vector<8x128xbf16>, vector<128x128xbf16>, vector<8x128xf32> -> vector<8x128xf32>
    %63 = vector.shape_cast %23 : vector<128xf32> to vector<1x128xf32>
    %64 = vector.broadcast %63 : vector<1x128xf32> to vector<8x128xf32>
    %65 = arith.addf %62, %64 : vector<8x128xf32>
    %66 = arith.mulf %11, %65 : vector<8x128xf32>
    %67 = arith.addf %3, %66 : vector<8x128xf32>
    %cst_23 = arith.constant dense<0.000000e+00> : vector<8xf32>
    %68 = vector.multi_reduction <add>, %67, %cst_23 [1] : vector<8x128xf32> to vector<8xf32>
    %69 = vector.shape_cast %68 : vector<8xf32> to vector<8x1xf32>
    %cst_24 = arith.constant 1.562500e-02 : f32
    %70 = vector.broadcast %cst_24 : f32 to vector<8x1xf32>
    %71 = arith.mulf %69, %70 : vector<8x1xf32>
    %72 = arith.mulf %67, %67 : vector<8x128xf32>
    %cst_25 = arith.constant dense<0.000000e+00> : vector<8xf32>
    %73 = vector.multi_reduction <add>, %72, %cst_25 [1] : vector<8x128xf32> to vector<8xf32>
    %74 = vector.shape_cast %73 : vector<8xf32> to vector<8x1xf32>
    %cst_26 = arith.constant 1.562500e-02 : f32
    %75 = vector.broadcast %cst_26 : f32 to vector<8x1xf32>
    %76 = arith.mulf %74, %75 : vector<8x1xf32>
    %77 = arith.mulf %71, %71 : vector<8x1xf32>
    %78 = arith.subf %76, %77 : vector<8x1xf32>
    %79 = vector.broadcast %71 : vector<8x1xf32> to vector<8x128xf32>
    %80 = arith.subf %67, %79 : vector<8x128xf32>
    %cst_27 = arith.constant 9.99999997E-7 : f32
    %81 = vector.broadcast %cst_27 : f32 to vector<8x1xf32>
    %82 = arith.addf %78, %81 : vector<8x1xf32>
    %83 = math.rsqrt %82 : vector<8x1xf32>
    %84 = vector.broadcast %83 : vector<8x1xf32> to vector<8x128xf32>
    %85 = arith.mulf %80, %84 : vector<8x128xf32>
    %cst_28 = arith.constant 1.000000e+00 : f32
    %86 = vector.broadcast %cst_28 : f32 to vector<8x128xf32>
    %87 = arith.addf %86, %15 : vector<8x128xf32>
    %88 = arith.mulf %85, %87 : vector<8x128xf32>
    %89 = arith.addf %88, %13 : vector<8x128xf32>
    %90 = arith.truncf %89 : vector<8x128xf32> to vector<8x128xbf16>
    %c0_29 = arith.constant 0 : index
    %c0_30 = arith.constant 0 : index
    %c0_31 = arith.constant 0 : index
    %91 = vector.load %arg5[%c0_29, %c0_30, %c0_31] : memref<1x128x128xbf16, #tpu.memory_space<vmem>>, vector<1x128x128xbf16>
    %92 = vector.shape_cast %91 : vector<1x128x128xbf16> to vector<128x128xbf16>
    %cst_32 = arith.constant dense<0.000000e+00> : vector<8x128xf32>
    %93 = tpu.matmul %90, %92, %cst_32 {dimension_numbers = #tpu.dot_dimension_numbers<[1], [0], [0], [1], [0, 0, 1, 1], [], []>} : vector<8x128xbf16>, vector<128x128xbf16>, vector<8x128xf32> -> vector<8x128xf32>
    %94 = vector.shape_cast %25 : vector<128xf32> to vector<1x128xf32>
    %95 = vector.broadcast %94 : vector<1x128xf32> to vector<8x128xf32>
    %96 = arith.addf %93, %95 : vector<8x128xf32>
    %cst_33 = arith.constant 0.000000e+00 : f32
    %97 = vector.broadcast %cst_33 : f32 to vector<8x128xf32>
    %98 = arith.maximumf %96, %97 : vector<8x128xf32>
    %99 = arith.truncf %98 : vector<8x128xf32> to vector<8x128xbf16>
    %c0_34 = arith.constant 0 : index
    %c0_35 = arith.constant 0 : index
    %c0_36 = arith.constant 0 : index
    %100 = vector.load %arg6[%c0_34, %c0_35, %c0_36] : memref<1x128x128xbf16, #tpu.memory_space<vmem>>, vector<1x128x128xbf16>
    %101 = vector.shape_cast %100 : vector<1x128x128xbf16> to vector<128x128xbf16>
    %cst_37 = arith.constant dense<0.000000e+00> : vector<8x128xf32>
    %102 = tpu.matmul %99, %101, %cst_37 {dimension_numbers = #tpu.dot_dimension_numbers<[1], [0], [0], [1], [0, 0, 1, 1], [], []>} : vector<8x128xbf16>, vector<128x128xbf16>, vector<8x128xf32> -> vector<8x128xf32>
    %103 = vector.shape_cast %27 : vector<128xf32> to vector<1x128xf32>
    %104 = vector.broadcast %103 : vector<1x128xf32> to vector<8x128xf32>
    %105 = arith.addf %102, %104 : vector<8x128xf32>
    %106 = arith.mulf %17, %105 : vector<8x128xf32>
    %107 = arith.addf %67, %106 : vector<8x128xf32>
    %108 = arith.addf %3, %107 : vector<8x128xf32>
    %c0_38 = arith.constant 0 : index
    %c0_39 = arith.constant 0 : index
    %109 = vector.load %arg8[%c0_38, %c0_39] : memref<8x128xf32, #tpu.memory_space<vmem>>, vector<8x128xf32>
    tpu.vector_store %arg8[%c0_38, %c0_39], %108 {strides = array<i32>} : memref<8x128xf32, #tpu.memory_space<vmem>>, vector<8x128xf32>,
    return
  }
  func.func @transform_0(%arg0: i32) -> (i32, i32) {
    %c0_i32 = arith.constant 0 : i32
    %c0_i32_0 = arith.constant 0 : i32
    %c0_i32_1 = arith.constant 0 : i32
    return %c0_i32, %c0_i32_0 : i32, i32
  }
  func.func @transform_1(%arg0: i32) -> (i32, i32, i32, i32) {
    %c0_i32 = arith.constant 0 : i32
    %c0_i32_0 = arith.constant 0 : i32
    %c0_i32_1 = arith.constant 0 : i32
    %c0_i32_2 = arith.constant 0 : i32
    return %arg0, %c0_i32, %c0_i32_0, %c0_i32_1 : i32, i32, i32, i32
  }
  func.func @transform_2(%arg0: i32) -> (i32, i32, i32) {
    %c0_i32 = arith.constant 0 : i32
    %c0_i32_0 = arith.constant 0 : i32
    %c0_i32_1 = arith.constant 0 : i32
    return %arg0, %c0_i32, %c0_i32_0 : i32, i32, i32
  }
  func.func @transform_3(%arg0: i32) -> (i32, i32, i32) {
    %c0_i32 = arith.constant 0 : i32
    %c0_i32_0 = arith.constant 0 : i32
    %c0_i32_1 = arith.constant 0 : i32
    return %arg0, %c0_i32, %c0_i32_0 : i32, i32, i32
  }
  func.func @transform_4(%arg0: i32) -> (i32, i32, i32) {
    %c0_i32 = arith.constant 0 : i32
    %c0_i32_0 = arith.constant 0 : i32
    %c0_i32_1 = arith.constant 0 : i32
    return %arg0, %c0_i32, %c0_i32_0 : i32, i32, i32
  }
  func.func @transform_5(%arg0: i32) -> (i32, i32, i32) {
    %c0_i32 = arith.constant 0 : i32
    %c0_i32_0 = arith.constant 0 : i32
    %c0_i32_1 = arith.constant 0 : i32
    return %arg0, %c0_i32, %c0_i32_0 : i32, i32, i32
  }
  func.func @transform_6(%arg0: i32) -> (i32, i32, i32) {
    %c0_i32 = arith.constant 0 : i32
    %c0_i32_0 = arith.constant 0 : i32
    %c0_i32_1 = arith.constant 0 : i32
    return %arg0, %c0_i32, %c0_i32_0 : i32, i32, i32
  }
  func.func @transform_7(%arg0: i32) -> (i32, i32) {
    %c0_i32 = arith.constant 0 : i32
    %c0_i32_0 = arith.constant 0 : i32
    %c0_i32_1 = arith.constant 0 : i32
    return %c0_i32, %c0_i32_0 : i32, i32
  }
}

</mosaic_0001>

<llo_original>
// kernel: diffmlp_forward.1
$region0: #{diffmlp_forward.1}
  #allocation0 [shape = 'u32[]', space=smem, size = 0x4, offset = 0x4, fixed_abs, tag = 'smem constant byte address 0x4 - core index']
  #allocation1 [shape = 'u32[144,128]{1,0:T(1,128)}', space=vmem, size = 0x12000, scoped, tag = 'internal scratch']
  %s0 = inlined_call_operand.vmem [shape: f32[8,128], index: 0, kind: input, shape index: {}]
  %s1 = inlined_call_operand.vmem [shape: f32[2,6,8,128], index: 1, kind: input, shape index: {}]
  %s2 = inlined_call_operand.vmem [shape: bf16[2,128,128], index: 2, kind: input, shape index: {}]
  %s3 = inlined_call_operand.vmem [shape: bf16[2,128,128], index: 3, kind: input, shape index: {}]
  %s4 = inlined_call_operand.vmem [shape: bf16[2,128,128], index: 4, kind: input, shape index: {}]
  %s5 = inlined_call_operand.vmem [shape: bf16[2,128,128], index: 5, kind: input, shape index: {}]
  %s6 = inlined_call_operand.vmem [shape: f32[2,4,128], index: 6, kind: input, shape index: {}]
  %s7 = inlined_call_operand.hbm [shape: f32[8,128], index: 7, kind: output, shape index: {}]
  %s8 = sld [smem:[#allocation0]]
  $region65: #{diffmlp_forward.1} parent=0
    _
  %s10 = ssub.s32 1, %s8
  %s11 = scalar_select 0, %s10, %s8
  $region1: #{diffmlp_forward.1} parent=0
    #allocation2 [shape = 'u8[4096]{0}', space=vmem, size = 0x1000, scoped, tag = 'output window, operand 0, single buffered']
    #allocation3 [shape = 's32[2]{0}', space=sflag, size = 0x8, scoped, tag = 'scoped memory for diffmlp_forward.1']
    %12 = vsyncpa [#allocation3], 0
    loop: start=0, step=1, limit=4
    $region2: #{diffmlp_forward.1} parent=1 // loop_pre_header
      _
    $region3: #{diffmlp_forward.1} parent=1 // loop_header
      %s14 = sphi 0, %s18
      %p15 = scmp.ge.s32.totalorder %s14, 4
      %s22 = sphi 0, %s22
      %s24 = sphi 0, %s22
      %s25 = sphi 0, %s24
      %s39 = sphi 0, %s25
      %s45 = sphi 0, %s47
      %s48 = sphi 0, %s45
      %s49 = sphi 0, %s48
      %s65 = sphi 0, %s49
      %s71 = sphi 0, %s73
      %s74 = sphi 0, %s71
      %s75 = sphi 0, %s74
      %s91 = sphi 0, %s75
      %s97 = sphi 0, %s99
      %s100 = sphi 0, %s97
      %s101 = sphi 0, %s100
      %s117 = sphi 0, %s101
      %s123 = sphi 0, %s125
      %s126 = sphi 0, %s123
      %s127 = sphi 0, %s126
      %s143 = sphi 0, %s127
      %s149 = sphi 0, %s151
      %s152 = sphi 0, %s149
      %s153 = sphi 0, %s152
      %s169 = sphi 0, %s153
      %s175 = sphi 0, %s177
      %s178 = sphi 0, %s175
      %s179 = sphi 0, %s178
      %s195 = sphi 0, %s179
      %s199 = sphi 0, %s199
      %s201 = sphi 0, %s199
      %s202 = sphi 0, %s201
      %s216 = sphi 0, %s202
    $region4: #{diffmlp_forward.1} parent=1 // loop_header_branch
      %17 = sbr.rel (%p15) target = $region8
    $region5: #{diffmlp_forward.1} parent=1 // loop_body
      %s19 = ssub.s32 %s14, 1
      %s20 = ssub.s32 %s14, 2
      %s21 = sadd.s32 %s14, 1
      %s23 = sadd.s32 %s22, 1
      %p26 = scmp.eq.s32.totalorder %s14, 1
      %p27 = scmp.ne.s32.totalorder %s22, %s24
      %p28 = scmp.eq.s32.totalorder %s14, 0
      %p29 = por %p27, %p28
      %p30 = scmp.ne.s32.totalorder %s22, %s24
      %p31 = scmp.eq.s32.totalorder %s19, 1
      %p32 = por %p30, %p31
      %p33 = scmp.ne.s32.totalorder %s24, %s25
      %p34 = scmp.eq.s32.totalorder %s19, 0
      %p35 = por %p33, %p34
      %p36 = scmp.ne.s32.totalorder %s24, %s25
      %p37 = scmp.eq.s32.totalorder %s20, 1
      %p38 = por %p36, %p37
      %p40 = scmp.ne.s32.totalorder %s25, %s39
      %p41 = scmp.eq.s32.totalorder %s20, 0
      %p42 = por %p40, %p41
      %s43 = ssub.s32 %s14, %s21
      %p44 = scmp.eq.s32.totalorder %s43, 0
      %s46 = sadd.s32 %s45, 1
      %s47 = scalar_select %p44, %s45, %s46
      %p50 = pneg %p44
      %p51 = scmp.eq.s32.totalorder %s14, 1
      %p52 = por %p50, %p51
      %p53 = scmp.ne.s32.totalorder %s45, %s48
      %p54 = scmp.eq.s32.totalorder %s14, 0
      %p55 = por %p53, %p54
      %p56 = scmp.ne.s32.totalorder %s45, %s48
      %p57 = scmp.eq.s32.totalorder %s19, 1
      %p58 = por %p56, %p57
      %p59 = scmp.ne.s32.totalorder %s48, %s49
      %p60 = scmp.eq.s32.totalorder %s19, 0
      %p61 = por %p59, %p60
      %p62 = scmp.ne.s32.totalorder %s48, %s49
      %p63 = scmp.eq.s32.totalorder %s20, 1
      %p64 = por %p62, %p63
      %p66 = scmp.ne.s32.totalorder %s49, %s65
      %p67 = scmp.eq.s32.totalorder %s20, 0
      %p68 = por %p66, %p67
      %s69 = ssub.s32 %s14, %s21
      %p70 = scmp.eq.s32.totalorder %s69, 0
      %s72 = sadd.s32 %s71, 1
      %s73 = scalar_select %p70, %s71, %s72
      %p76 = pneg %p70
      %p77 = scmp.eq.s32.totalorder %s14, 1
      %p78 = por %p76, %p77
      %p79 = scmp.ne.s32.totalorder %s71, %s74
      %p80 = scmp.eq.s32.totalorder %s14, 0
      %p81 = por %p79, %p80
      %p82 = scmp.ne.s32.totalorder %s71, %s74
      %p83 = scmp.eq.s32.totalorder %s19, 1
      %p84 = por %p82, %p83
      %p85 = scmp.ne.s32.totalorder %s74, %s75
      %p86 = scmp.eq.s32.totalorder %s19, 0
      %p87 = por %p85, %p86
      %p88 = scmp.ne.s32.totalorder %s74, %s75
      %p89 = scmp.eq.s32.totalorder %s20, 1
      %p90 = por %p88, %p89
      %p92 = scmp.ne.s32.totalorder %s75, %s91
      %p93 = scmp.eq.s32.totalorder %s20, 0
      %p94 = por %p92, %p93
      %s95 = ssub.s32 %s14, %s21
      %p96 = scmp.eq.s32.totalorder %s95, 0
      %s98 = sadd.s32 %s97, 1
      %s99 = scalar_select %p96, %s97, %s98
      %p102 = pneg %p96
      %p103 = scmp.eq.s32.totalorder %s14, 1
      %p104 = por %p102, %p103
      %p105 = scmp.ne.s32.totalorder %s97, %s100
      %p106 = scmp.eq.s32.totalorder %s14, 0
      %p107 = por %p105, %p106
      %p108 = scmp.ne.s32.totalorder %s97, %s100
      %p109 = scmp.eq.s32.totalorder %s19, 1
      %p110 = por %p108, %p109
      %p111 = scmp.ne.s32.totalorder %s100, %s101
      %p112 = scmp.eq.s32.totalorder %s19, 0
      %p113 = por %p111, %p112
      %p114 = scmp.ne.s32.totalorder %s100, %s101
      %p115 = scmp.eq.s32.totalorder %s20, 1
      %p116 = por %p114, %p115
      %p118 = scmp.ne.s32.totalorder %s101, %s117
      %p119 = scmp.eq.s32.totalorder %s20, 0
      %p120 = por %p118, %p119
      %s121 = ssub.s32 %s14, %s21
      %p122 = scmp.eq.s32.totalorder %s121, 0
      %s124 = sadd.s32 %s123, 1
      %s125 = scalar_select %p122, %s123, %s124
      %p128 = pneg %p122
      %p129 = scmp.eq.s32.totalorder %s14, 1
      %p130 = por %p128, %p129
      %p131 = scmp.ne.s32.totalorder %s123, %s126
      %p132 = scmp.eq.s32.totalorder %s14, 0
      %p133 = por %p131, %p132
      %p134 = scmp.ne.s32.totalorder %s123, %s126
      %p135 = scmp.eq.s32.totalorder %s19, 1
      %p136 = por %p134, %p135
      %p137 = scmp.ne.s32.totalorder %s126, %s127
      %p138 = scmp.eq.s32.totalorder %s19, 0
      %p139 = por %p137, %p138
      %p140 = scmp.ne.s32.totalorder %s126, %s127
      %p141 = scmp.eq.s32.totalorder %s20, 1
      %p142 = por %p140, %p141
      %p144 = scmp.ne.s32.totalorder %s127, %s143
      %p145 = scmp.eq.s32.totalorder %s20, 0
      %p146 = por %p144, %p145
      %s147 = ssub.s32 %s14, %s21
      %p148 = scmp.eq.s32.totalorder %s147, 0
      %s150 = sadd.s32 %s149, 1
      %s151 = scalar_select %p148, %s149, %s150
      %p154 = pneg %p148
      %p155 = scmp.eq.s32.totalorder %s14, 1
      %p156 = por %p154, %p155
      %p157 = scmp.ne.s32.totalorder %s149, %s152
      %p158 = scmp.eq.s32.totalorder %s14, 0
      %p159 = por %p157, %p158
      %p160 = scmp.ne.s32.totalorder %s149, %s152
      %p161 = scmp.eq.s32.totalorder %s19, 1
      %p162 = por %p160, %p161
      %p163 = scmp.ne.s32.totalorder %s152, %s153
      %p164 = scmp.eq.s32.totalorder %s19, 0
      %p165 = por %p163, %p164
      %p166 = scmp.ne.s32.totalorder %s152, %s153
      %p167 = scmp.eq.s32.totalorder %s20, 1
      %p168 = por %p166, %p167
      %p170 = scmp.ne.s32.totalorder %s153, %s169
      %p171 = scmp.eq.s32.totalorder %s20, 0
      %p172 = por %p170, %p171
      %s173 = ssub.s32 %s14, %s21
      %p174 = scmp.eq.s32.totalorder %s173, 0
      %s176 = sadd.s32 %s175, 1
      %s177 = scalar_select %p174, %s175, %s176
      %p180 = pneg %p174
      %p181 = scmp.eq.s32.totalorder %s14, 1
      %p182 = por %p180, %p181
      %p183 = scmp.ne.s32.totalorder %s175, %s178
      %p184 = scmp.eq.s32.totalorder %s14, 0
      %p185 = por %p183, %p184
      %p186 = scmp.ne.s32.totalorder %s175, %s178
      %p187 = scmp.eq.s32.totalorder %s19, 1
      %p188 = por %p186, %p187
      %p189 = scmp.ne.s32.totalorder %s178, %s179
      %p190 = scmp.eq.s32.totalorder %s19, 0
      %p191 = por %p189, %p190
      %p192 = scmp.ne.s32.totalorder %s178, %s179
      %p193 = scmp.eq.s32.totalorder %s20, 1
      %p194 = por %p192, %p193
      %p196 = scmp.ne.s32.totalorder %s179, %s195
      %p197 = scmp.eq.s32.totalorder %s20, 0
      %p198 = por %p196, %p197
      %s200 = sadd.s32 %s199, 1
      %p203 = scmp.eq.s32.totalorder %s14, 1
      %p204 = scmp.ne.s32.totalorder %s199, %s201
      %p205 = scmp.eq.s32.totalorder %s14, 0
      %p206 = por %p204, %p205
      %p207 = scmp.ne.s32.totalorder %s199, %s201
      %p208 = scmp.eq.s32.totalorder %s19, 1
      %p209 = por %p207, %p208
      %p210 = scmp.ne.s32.totalorder %s201, %s202
      %p211 = scmp.eq.s32.totalorder %s19, 0
      %p212 = por %p210, %p211
      %p213 = scmp.ne.s32.totalorder %s201, %s202
      %p214 = scmp.eq.s32.totalorder %s20, 1
      %p215 = por %p213, %p214
      %p217 = scmp.ne.s32.totalorder %s202, %s216
      %p218 = scmp.eq.s32.totalorder %s20, 0
      %p219 = por %p217, %p218
      %p220 = scmp.le.s32.totalorder 1, %s14
      %p221 = scmp.lt.s32.totalorder %s14, 3
      %p222 = pnand %p220, %p221
      %p223 = pneg %p222
      // Predicated region
      $region9: #{diffmlp_forward.1} parent=5 // pred_check
        _
      $region10: #{diffmlp_forward.1} parent=5 // pred_check_branch
        %225 = sbr.rel (%p222) target = $region12
      $region11: #{diffmlp_forward.1} parent=5 // pred_region
        %s226 = ssub.s32 %s14, 1
        // Predicated region
        $region13: #{diffmlp_forward.1} parent=11 // pred_check
          %p227 = pneg %p35
        $region14: #{diffmlp_forward.1} parent=11 // pred_check_branch
          %229 = sbr.rel (%p227) target = $region16
        $region15: #{diffmlp_forward.1} parent=11 // pred_region
          _
        $region16: #{diffmlp_forward.1} parent=11 // pred_fallthru
          _
      $region12: #{diffmlp_forward.1} parent=5 // pred_fallthru
        _
      %p230 = scmp.lt.s32.totalorder %s14, 2
      // Predicated region
      $region17: #{diffmlp_forward.1} parent=5 // pred_check
        %p231 = pneg %p230
      $region18: #{diffmlp_forward.1} parent=5 // pred_check_branch
        %233 = sbr.rel (%p231) target = $region20
      $region19: #{diffmlp_forward.1} parent=5 // pred_region
        // Predicated region
        $region21: #{diffmlp_forward.1} parent=19 // pred_check
          %p234 = pneg %p55
        $region22: #{diffmlp_forward.1} parent=19 // pred_check_branch
          %236 = sbr.rel (%p234) target = $region24
        $region23: #{diffmlp_forward.1} parent=19 // pred_region
          %p237 = scmp.lt.s32.totalorder %s14, 1
          %s238 = scalar_select %p237, %s14, 1
          %s239 = smul.addr %s238, 6
          %s240 = smul.addr %s239, 8
          %s241 = scalar_lea.vmem %s1, %s240
        $region24: #{diffmlp_forward.1} parent=19 // pred_fallthru
          _
        // Predicated region
        $region25: #{diffmlp_forward.1} parent=19 // pred_check
          %p242 = pneg %p81
        $region26: #{diffmlp_forward.1} parent=19 // pred_check_branch
          %244 = sbr.rel (%p242) target = $region28
        $region27: #{diffmlp_forward.1} parent=19 // pred_region
          %p245 = scmp.lt.s32.totalorder %s14, 1
          %s246 = scalar_select %p245, %s14, 1
          %s247 = smul.addr %s246, 16
          %s248 = smul.addr %s247, 4
          %s249 = scalar_lea.vmem %s2, %s248
        $region28: #{diffmlp_forward.1} parent=19 // pred_fallthru
          _
        // Predicated region
        $region29: #{diffmlp_forward.1} parent=19 // pred_check
          %p250 = pneg %p107
        $region30: #{diffmlp_forward.1} parent=19 // pred_check_branch
          %252 = sbr.rel (%p250) target = $region32
        $region31: #{diffmlp_forward.1} parent=19 // pred_region
          %p253 = scmp.lt.s32.totalorder %s14, 1
          %s254 = scalar_select %p253, %s14, 1
          %s255 = smul.addr %s254, 16
          %s256 = smul.addr %s255, 4
          %s257 = scalar_lea.vmem %s3, %s256
        $region32: #{diffmlp_forward.1} parent=19 // pred_fallthru
          _
        // Predicated region
        $region33: #{diffmlp_forward.1} parent=19 // pred_check
          %p258 = pneg %p133
        $region34: #{diffmlp_forward.1} parent=19 // pred_check_branch
          %260 = sbr.rel (%p258) target = $region36
        $region35: #{diffmlp_forward.1} parent=19 // pred_region
          %p261 = scmp.lt.s32.totalorder %s14, 1
          %s262 = scalar_select %p261, %s14, 1
          %s263 = smul.addr %s262, 16
          %s264 = smul.addr %s263, 4
          %s265 = scalar_lea.vmem %s4, %s264
        $region36: #{diffmlp_forward.1} parent=19 // pred_fallthru
          _
        // Predicated region
        $region37: #{diffmlp_forward.1} parent=19 // pred_check
          %p266 = pneg %p159
        $region38: #{diffmlp_forward.1} parent=19 // pred_check_branch
          %268 = sbr.rel (%p266) target = $region40
        $region39: #{diffmlp_forward.1} parent=19 // pred_region
          %p269 = scmp.lt.s32.totalorder %s14, 1
          %s270 = scalar_select %p269, %s14, 1
          %s271 = smul.addr %s270, 16
          %s272 = smul.addr %s271, 4
          %s273 = scalar_lea.vmem %s5, %s272
        $region40: #{diffmlp_forward.1} parent=19 // pred_fallthru
          _
        // Predicated region
        $region41: #{diffmlp_forward.1} parent=19 // pred_check
          %p274 = pneg %p185
        $region42: #{diffmlp_forward.1} parent=19 // pred_check_branch
          %276 = sbr.rel (%p274) target = $region44
        $region43: #{diffmlp_forward.1} parent=19 // pred_region
          %p277 = scmp.lt.s32.totalorder %s14, 1
          %s278 = scalar_select %p277, %s14, 1
          %s279 = smul.addr %s278, 4
          %s280 = scalar_lea.vmem %s6, %s279
        $region44: #{diffmlp_forward.1} parent=19 // pred_fallthru
          _
      $region20: #{diffmlp_forward.1} parent=5 // pred_fallthru
        _
      %p281 = scmp.le.s32.totalorder 1, %s14
      %p282 = scmp.lt.s32.totalorder %s14, 3
      %p283 = pnand %p281, %p282
      %p284 = pneg %p283
      // Predicated region
      $region45: #{diffmlp_forward.1} parent=5 // pred_check
        _
      $region46: #{diffmlp_forward.1} parent=5 // pred_check_branch
        %286 = sbr.rel (%p283) target = $region48
      $region47: #{diffmlp_forward.1} parent=5 // pred_region
        %s287 = ssub.s32 %s14, 1
        %p288 = pneg %p35
        %p289 = pneg %p32
        %p290 = scmp.lt.s32.totalorder %s19, 1
        %s291 = scalar_select %p290, %s19, 1
        %s292 = smul.addr %s291, 6
        %s293 = smul.addr %s292, 8
        %s294 = scalar_lea.vmem %s1, %s293
        %p295 = pneg %p61
        %p296 = pneg %p58
        %p297 = scmp.lt.s32.totalorder %s19, 1
        %s298 = scalar_select %p297, %s19, 1
        %s299 = smul.addr %s298, 16
        %s300 = smul.addr %s299, 4
        %s301 = scalar_lea.vmem %s2, %s300
        %p302 = pneg %p87
        %p303 = pneg %p84
        %p304 = scmp.lt.s32.totalorder %s19, 1
        %s305 = scalar_select %p304, %s19, 1
        %s306 = smul.addr %s305, 16
        %s307 = smul.addr %s306, 4
        %s308 = scalar_lea.vmem %s3, %s307
        %p309 = pneg %p113
        %p310 = pneg %p110
        %p311 = scmp.lt.s32.totalorder %s19, 1
        %s312 = scalar_select %p311, %s19, 1
        %s313 = smul.addr %s312, 16
        %s314 = smul.addr %s313, 4
        %s315 = scalar_lea.vmem %s4, %s314
        %p316 = pneg %p139
        %p317 = pneg %p136
        %p318 = scmp.lt.s32.totalorder %s19, 1
        %s319 = scalar_select %p318, %s19, 1
        %s320 = smul.addr %s319, 16
        %s321 = smul.addr %s320, 4
        %s322 = scalar_lea.vmem %s5, %s321
        %p323 = pneg %p165
        %p324 = pneg %p162
        %p325 = scmp.lt.s32.totalorder %s19, 1
        %s326 = scalar_select %p325, %s19, 1
        %s327 = smul.addr %s326, 4
        %s328 = scalar_lea.vmem %s6, %s327
        %p329 = pneg %p191
        %p330 = pneg %p188
        %p331 = pneg %p212
        %p332 = pneg %p209
        %p333 = scmp.lt.s32.totalorder %s19, 1
        %s334 = scalar_select %p333, %s19, 1
        %s335 = smul.addr %s334, 6
        %s336 = smul.addr %s335, 8
        %s337 = scalar_lea.vmem %s1, %s336
        %p338 = scmp.lt.s32.totalorder %s19, 1
        %s339 = scalar_select %p338, %s19, 1
        %s340 = smul.addr %s339, 16
        %s341 = smul.addr %s340, 4
        %s342 = scalar_lea.vmem %s2, %s341
        %p343 = scmp.lt.s32.totalorder %s19, 1
        %s344 = scalar_select %p343, %s19, 1
        %s345 = smul.addr %s344, 16
        %s346 = smul.addr %s345, 4
        %s347 = scalar_lea.vmem %s3, %s346
        %p348 = scmp.lt.s32.totalorder %s19, 1
        %s349 = scalar_select %p348, %s19, 1
        %s350 = smul.addr %s349, 16
        %s351 = smul.addr %s350, 4
        %s352 = scalar_lea.vmem %s4, %s351
        %p353 = scmp.lt.s32.totalorder %s19, 1
        %s354 = scalar_select %p353, %s19, 1
        %s355 = smul.addr %s354, 16
        %s356 = smul.addr %s355, 4
        %s357 = scalar_lea.vmem %s5, %s356
        %p358 = scmp.lt.s32.totalorder %s19, 1
        %s359 = scalar_select %p358, %s19, 1
        %s360 = smul.addr %s359, 4
        %s361 = scalar_lea.vmem %s6, %s360
        %p363 = scmp.eq.s32.totalorder %s19, 0
        // Predicated region
        $region49: #{diffmlp_forward.1} parent=47 // pred_check
          %p364 = pneg %p363
        $region50: #{diffmlp_forward.1} parent=47 // pred_check_branch
          %366 = sbr.rel (%p364) target = $region52
        $region51: #{diffmlp_forward.1} parent=47 // pred_region
          %v367 = vld [vmem:[%s0] sm:$0xff]
          %368 = vst [vmem:[#allocation2] sm:$0xff] %v367
        $region52: #{diffmlp_forward.1} parent=47 // pred_fallthru
          _
        %v369 = vld [vmem:[#allocation2] sm:$0xff]
        %v370 = vld [vmem:[%s337] sm:$0xff]
        %v371 = vld [vmem:[%s337 + $0x8] sm:$0xff]
        %v372 = vld [vmem:[%s337 + $0x10] sm:$0xff]
        %v373 = vld [vmem:[%s337 + $0x18] sm:$0xff]
        %v374 = vld [vmem:[%s337 + $0x20] sm:$0xff]
        %v375 = vld [vmem:[%s337 + $0x28] sm:$0xff]
        %v376 = vld [vmem:[%s361] sm:$0xf]
        %377 = vadd.xlane.f32.xlu0 %v369
        %v378 = vpop.xlane.xlu0 %377
        %v379 = vmul.f32 %v378, 0.015625
        %v380 = vmul.f32 %v369, %v369
        %381 = vadd.xlane.f32.xlu0 %v380
        %v382 = vpop.xlane.xlu0 %381
        %v383 = vmul.f32 %v382, 0.015625
        %v384 = vmul.f32 %v379, %v379
        %v385 = vsub.f32 %v383, %v384
        %v386 = vsub.f32 %v369, %v379
        %v387 = vadd.f32 %v385, 1e-06
        %v388 = vrsqrt.pop %v387
        %v389 = vmul.f32 %v386, %v388
        %v390 = vadd.f32 %v371, 1.0
        %v391 = vmul.f32 %v389, %v390
        %v392 = vadd.f32 %v391, %v370
        %v393 = vpack.c.bf16 %v392, %v392
        %v394 = vld [vmem:[%s342] sm:$0xf]
        %v395 = vld [vmem:[%s342 + $0x4] sm:$0xf]
        %v396 = vld [vmem:[%s342 + $0x8] sm:$0xf]
        %v397 = vld [vmem:[%s342 + $0xc] sm:$0xf]
        %v398 = vld [vmem:[%s342 + $0x10] sm:$0xf]
        %v399 = vld [vmem:[%s342 + $0x14] sm:$0xf]
        %v400 = vld [vmem:[%s342 + $0x18] sm:$0xf]
        %v401 = vld [vmem:[%s342 + $0x1c] sm:$0xf]
        %v402 = vld [vmem:[%s342 + $0x20] sm:$0xf]
        %v403 = vld [vmem:[%s342 + $0x24] sm:$0xf]
        %v404 = vld [vmem:[%s342 + $0x28] sm:$0xf]
        %v405 = vld [vmem:[%s342 + $0x2c] sm:$0xf]
        %v406 = vld [vmem:[%s342 + $0x30] sm:$0xf]
        %v407 = vld [vmem:[%s342 + $0x34] sm:$0xf]
        %v408 = vld [vmem:[%s342 + $0x38] sm:$0xf]
        %v409 = vld [vmem:[%s342 + $0x3c] sm:$0xf]
        %v410 = vlaneseq
        %v411 = vshrl.u32 %v410, 7
        %v412 = vsub.s32 0, %v411
        %v413 = vrot.slane %v376, %v412
        %v430 = vunpack.c.l.b16 %v394
        %v431 = vunpack.c.l.b16 %v395
        %v432 = vunpack.c.l.b16 %v396
        %v433 = vunpack.c.l.b16 %v397
        %v434 = vunpack.c.l.b16 %v398
        %v435 = vunpack.c.l.b16 %v399
        %v436 = vunpack.c.l.b16 %v400
        %v437 = vunpack.c.l.b16 %v401
        %v438 = vunpack.c.l.b16 %v402
        %v439 = vunpack.c.l.b16 %v403
        %v440 = vunpack.c.l.b16 %v404
        %v441 = vunpack.c.l.b16 %v405
        %v442 = vunpack.c.l.b16 %v406
        %v443 = vunpack.c.l.b16 %v407
        %v444 = vunpack.c.l.b16 %v408
        %v445 = vunpack.c.l.b16 %v409
        %v446 = vpack.c.b16 %v431, %v430
        %v447 = vpack.c.b16 %v433, %v432
        %v448 = vpack.c.b16 %v435, %v434
        %v449 = vpack.c.b16 %v437, %v436
        %v450 = vpack.c.b16 %v439, %v438
        %v451 = vpack.c.b16 %v441, %v440
        %v452 = vpack.c.b16 %v443, %v442
        %v453 = vpack.c.b16 %v445, %v444
        %462 = vmatprep.subr.bf16.mxu0 0
        %463 = vmatpush1.bf16.msra.mxu0 %v446
        %464 = vmatprep.subr.bf16.mxu0 0
        %465 = vmatpush1.bf16.msra.mxu0 %v447
        %466 = vmatprep.subr.bf16.mxu0 0
        %467 = vmatpush1.bf16.msra.mxu0 %v448
        %468 = vmatprep.subr.bf16.mxu0 0
        %469 = vmatpush1.bf16.msra.mxu0 %v449
        %470 = vmatprep.subr.bf16.mxu0 0
        %471 = vmatpush1.bf16.msra.mxu0 %v450
        %472 = vmatprep.subr.bf16.mxu0 0
        %473 = vmatpush1.bf16.msra.mxu0 %v451
        %474 = vmatprep.subr.bf16.mxu0 0
        %475 = vmatpush1.bf16.msra.mxu0 %v452
        %476 = vmatprep.subr.bf16.mxu0 0
        %477 = vmatpush1.bf16.msra.mxu0 %v453
        %478 = vmatprep.subr.bf16.mxu0 0
        %479 = vmatpush1.bf16.msra.mxu0 0
        %480 = vmatprep.subr.bf16.mxu0 0
        %481 = vmatpush1.bf16.msra.mxu0 0
        %482 = vmatprep.subr.bf16.mxu0 0
        %483 = vmatpush1.bf16.msra.mxu0 0
        %484 = vmatprep.subr.bf16.mxu0 0
        %485 = vmatpush1.bf16.msra.mxu0 0
        %486 = vmatprep.subr.bf16.mxu0 0
        %487 = vmatpush1.bf16.msra.mxu0 0
        %488 = vmatprep.subr.bf16.mxu0 0
        %489 = vmatpush1.bf16.msra.mxu0 0
        %490 = vmatprep.subr.bf16.mxu0 0
        %491 = vmatpush1.bf16.msra.mxu0 0
        %492 = vmatprep.subr.bf16.mxu0 0
        %493 = vmatpush1.bf16.msra.mxu0 0
        %494 = vmatprep.mubr.bf16.mxu0 0
        %495 = vmatmul.mubr.bf16.gmra.mrb[0].mxu0 %v393
        %v496 = vpop.f32.mrb[0].mxu0
        %v497 = vadd.f32 %v413, %v496
        %v498 = vpop.f32.mrb[0].mxu0
        %v499 = vpop.f32.mrb[0].mxu0
        %v500 = vpop.f32.mrb[0].mxu0
        %501 = vdwg.mxu0
        %v502 = vmax.f32 %v497, 0.0
        %v503 = vpack.c.bf16 %v502, %v502
        %v504 = vld [vmem:[%s347] sm:$0xf]
        %v505 = vld [vmem:[%s347 + $0x4] sm:$0xf]
        %v506 = vld [vmem:[%s347 + $0x8] sm:$0xf]
        %v507 = vld [vmem:[%s347 + $0xc] sm:$0xf]
        %v508 = vld [vmem:[%s347 + $0x10] sm:$0xf]
        %v509 = vld [vmem:[%s347 + $0x14] sm:$0xf]
        %v510 = vld [vmem:[%s347 + $0x18] sm:$0xf]
        %v511 = vld [vmem:[%s347 + $0x1c] sm:$0xf]
        %v512 = vld [vmem:[%s347 + $0x20] sm:$0xf]
        %v513 = vld [vmem:[%s347 + $0x24] sm:$0xf]
        %v514 = vld [vmem:[%s347 + $0x28] sm:$0xf]
        %v515 = vld [vmem:[%s347 + $0x2c] sm:$0xf]
        %v516 = vld [vmem:[%s347 + $0x30] sm:$0xf]
        %v517 = vld [vmem:[%s347 + $0x34] sm:$0xf]
        %v518 = vld [vmem:[%s347 + $0x38] sm:$0xf]
        %v519 = vld [vmem:[%s347 + $0x3c] sm:$0xf]
        %v520 = vlaneseq
        %v521 = vshrl.u32 %v520, 7
        %v522 = vsub.s32 1, %v521
        %v523 = vrot.slane %v376, %v522
        %v540 = vunpack.c.l.b16 %v504
        %v541 = vunpack.c.l.b16 %v505
        %v542 = vunpack.c.l.b16 %v506
        %v543 = vunpack.c.l.b16 %v507
        %v544 = vunpack.c.l.b16 %v508
        %v545 = vunpack.c.l.b16 %v509
        %v546 = vunpack.c.l.b16 %v510
        %v547 = vunpack.c.l.b16 %v511
        %v548 = vunpack.c.l.b16 %v512
        %v549 = vunpack.c.l.b16 %v513
        %v550 = vunpack.c.l.b16 %v514
        %v551 = vunpack.c.l.b16 %v515
        %v552 = vunpack.c.l.b16 %v516
        %v553 = vunpack.c.l.b16 %v517
        %v554 = vunpack.c.l.b16 %v518
        %v555 = vunpack.c.l.b16 %v519
        %v556 = vpack.c.b16 %v541, %v540
        %v557 = vpack.c.b16 %v543, %v542
        %v558 = vpack.c.b16 %v545, %v544
        %v559 = vpack.c.b16 %v547, %v546
        %v560 = vpack.c.b16 %v549, %v548
        %v561 = vpack.c.b16 %v551, %v550
        %v562 = vpack.c.b16 %v553, %v552
        %v563 = vpack.c.b16 %v555, %v554
        %572 = vmatprep.subr.bf16.mxu0 0
        %573 = vmatpush1.bf16.msra.mxu0 %v556
        %574 = vmatprep.subr.bf16.mxu0 0
        %575 = vmatpush1.bf16.msra.mxu0 %v557
        %576 = vmatprep.subr.bf16.mxu0 0
        %577 = vmatpush1.bf16.msra.mxu0 %v558
        %578 = vmatprep.subr.bf16.mxu0 0
        %579 = vmatpush1.bf16.msra.mxu0 %v559
        %580 = vmatprep.subr.bf16.mxu0 0
        %581 = vmatpush1.bf16.msra.mxu0 %v560
        %582 = vmatprep.subr.bf16.mxu0 0
        %583 = vmatpush1.bf16.msra.mxu0 %v561
        %584 = vmatprep.subr.bf16.mxu0 0
        %585 = vmatpush1.bf16.msra.mxu0 %v562
        %586 = vmatprep.subr.bf16.mxu0 0
        %587 = vmatpush1.bf16.msra.mxu0 %v563
        %588 = vmatprep.subr.bf16.mxu0 0
        %589 = vmatpush1.bf16.msra.mxu0 0
        %590 = vmatprep.subr.bf16.mxu0 0
        %591 = vmatpush1.bf16.msra.mxu0 0
        %592 = vmatprep.subr.bf16.mxu0 0
        %593 = vmatpush1.bf16.msra.mxu0 0
        %594 = vmatprep.subr.bf16.mxu0 0
        %595 = vmatpush1.bf16.msra.mxu0 0
        %596 = vmatprep.subr.bf16.mxu0 0
        %597 = vmatpush1.bf16.msra.mxu0 0
        %598 = vmatprep.subr.bf16.mxu0 0
        %599 = vmatpush1.bf16.msra.mxu0 0
        %600 = vmatprep.subr.bf16.mxu0 0
        %601 = vmatpush1.bf16.msra.mxu0 0
        %602 = vmatprep.subr.bf16.mxu0 0
        %603 = vmatpush1.bf16.msra.mxu0 0
        %604 = vmatprep.mubr.bf16.mxu0 0
        %605 = vmatmul.mubr.bf16.gmra.mrb[0].mxu0 %v503
        %v606 = vpop.f32.mrb[0].mxu0
        %v607 = vadd.f32 %v523, %v606
        %v608 = vpop.f32.mrb[0].mxu0
        %v609 = vpop.f32.mrb[0].mxu0
        %v610 = vpop.f32.mrb[0].mxu0
        %611 = vdwg.mxu0
        %v612 = vmul.f32 %v372, %v607
        %v613 = vadd.f32 %v369, %v612
        %614 = vadd.xlane.f32.xlu0 %v613
        %v615 = vpop.xlane.xlu0 %614
        %v616 = vmul.f32 %v615, 0.015625
        %v617 = vmul.f32 %v613, %v613
        %618 = vadd.xlane.f32.xlu0 %v617
        %v619 = vpop.xlane.xlu0 %618
        %v620 = vmul.f32 %v619, 0.015625
        %v621 = vmul.f32 %v616, %v616
        %v622 = vsub.f32 %v620, %v621
        %v623 = vsub.f32 %v613, %v616
        %v624 = vadd.f32 %v622, 1e-06
        %v625 = vrsqrt.pop %v624
        %v626 = vmul.f32 %v623, %v625
        %v627 = vadd.f32 %v374, 1.0
        %v628 = vmul.f32 %v626, %v627
        %v629 = vadd.f32 %v628, %v373
        %v630 = vpack.c.bf16 %v629, %v629
        %v631 = vld [vmem:[%s352] sm:$0xf]
        %v632 = vld [vmem:[%s352 + $0x4] sm:$0xf]
        %v633 = vld [vmem:[%s352 + $0x8] sm:$0xf]
        %v634 = vld [vmem:[%s352 + $0xc] sm:$0xf]
        %v635 = vld [vmem:[%s352 + $0x10] sm:$0xf]
        %v636 = vld [vmem:[%s352 + $0x14] sm:$0xf]
        %v637 = vld [vmem:[%s352 + $0x18] sm:$0xf]
        %v638 = vld [vmem:[%s352 + $0x1c] sm:$0xf]
        %v639 = vld [vmem:[%s352 + $0x20] sm:$0xf]
        %v640 = vld [vmem:[%s352 + $0x24] sm:$0xf]
        %v641 = vld [vmem:[%s352 + $0x28] sm:$0xf]
        %v642 = vld [vmem:[%s352 + $0x2c] sm:$0xf]
        %v643 = vld [vmem:[%s352 + $0x30] sm:$0xf]
        %v644 = vld [vmem:[%s352 + $0x34] sm:$0xf]
        %v645 = vld [vmem:[%s352 + $0x38] sm:$0xf]
        %v646 = vld [vmem:[%s352 + $0x3c] sm:$0xf]
        %v647 = vlaneseq
        %v648 = vshrl.u32 %v647, 7
        %v649 = vsub.s32 2, %v648
        %v650 = vrot.slane %v376, %v649
        %v667 = vunpack.c.l.b16 %v631
        %v668 = vunpack.c.l.b16 %v632
        %v669 = vunpack.c.l.b16 %v633
        %v670 = vunpack.c.l.b16 %v634
        %v671 = vunpack.c.l.b16 %v635
        %v672 = vunpack.c.l.b16 %v636
        %v673 = vunpack.c.l.b16 %v637
        %v674 = vunpack.c.l.b16 %v638
        %v675 = vunpack.c.l.b16 %v639
        %v676 = vunpack.c.l.b16 %v640
        %v677 = vunpack.c.l.b16 %v641
        %v678 = vunpack.c.l.b16 %v642
        %v679 = vunpack.c.l.b16 %v643
        %v680 = vunpack.c.l.b16 %v644
        %v681 = vunpack.c.l.b16 %v645
        %v682 = vunpack.c.l.b16 %v646
        %v683 = vpack.c.b16 %v668, %v667
        %v684 = vpack.c.b16 %v670, %v669
        %v685 = vpack.c.b16 %v672, %v671
        %v686 = vpack.c.b16 %v674, %v673
        %v687 = vpack.c.b16 %v676, %v675
        %v688 = vpack.c.b16 %v678, %v677
        %v689 = vpack.c.b16 %v680, %v679
        %v690 = vpack.c.b16 %v682, %v681
        %699 = vmatprep.subr.bf16.mxu0 0
        %700 = vmatpush1.bf16.msra.mxu0 %v683
        %701 = vmatprep.subr.bf16.mxu0 0
        %702 = vmatpush1.bf16.msra.mxu0 %v684
        %703 = vmatprep.subr.bf16.mxu0 0
        %704 = vmatpush1.bf16.msra.mxu0 %v685
        %705 = vmatprep.subr.bf16.mxu0 0
        %706 = vmatpush1.bf16.msra.mxu0 %v686
        %707 = vmatprep.subr.bf16.mxu0 0
        %708 = vmatpush1.bf16.msra.mxu0 %v687
        %709 = vmatprep.subr.bf16.mxu0 0
        %710 = vmatpush1.bf16.msra.mxu0 %v688
        %711 = vmatprep.subr.bf16.mxu0 0
        %712 = vmatpush1.bf16.msra.mxu0 %v689
        %713 = vmatprep.subr.bf16.mxu0 0
        %714 = vmatpush1.bf16.msra.mxu0 %v690
        %715 = vmatprep.subr.bf16.mxu0 0
        %716 = vmatpush1.bf16.msra.mxu0 0
        %717 = vmatprep.subr.bf16.mxu0 0
        %718 = vmatpush1.bf16.msra.mxu0 0
        %719 = vmatprep.subr.bf16.mxu0 0
        %720 = vmatpush1.bf16.msra.mxu0 0
        %721 = vmatprep.subr.bf16.mxu0 0
        %722 = vmatpush1.bf16.msra.mxu0 0
        %723 = vmatprep.subr.bf16.mxu0 0
        %724 = vmatpush1.bf16.msra.mxu0 0
        %725 = vmatprep.subr.bf16.mxu0 0
        %726 = vmatpush1.bf16.msra.mxu0 0
        %727 = vmatprep.subr.bf16.mxu0 0
        %728 = vmatpush1.bf16.msra.mxu0 0
        %729 = vmatprep.subr.bf16.mxu0 0
        %730 = vmatpush1.bf16.msra.mxu0 0
        %731 = vmatprep.mubr.bf16.mxu0 0
        %732 = vmatmul.mubr.bf16.gmra.mrb[0].mxu0 %v630
        %v733 = vpop.f32.mrb[0].mxu0
        %v734 = vadd.f32 %v650, %v733
        %v735 = vpop.f32.mrb[0].mxu0
        %v736 = vpop.f32.mrb[0].mxu0
        %v737 = vpop.f32.mrb[0].mxu0
        %738 = vdwg.mxu0
        %v739 = vmax.f32 %v734, 0.0
        %v740 = vpack.c.bf16 %v739, %v739
        %v741 = vld [vmem:[%s357] sm:$0xf]
        %v742 = vld [vmem:[%s357 + $0x4] sm:$0xf]
        %v743 = vld [vmem:[%s357 + $0x8] sm:$0xf]
        %v744 = vld [vmem:[%s357 + $0xc] sm:$0xf]
        %v745 = vld [vmem:[%s357 + $0x10] sm:$0xf]
        %v746 = vld [vmem:[%s357 + $0x14] sm:$0xf]
        %v747 = vld [vmem:[%s357 + $0x18] sm:$0xf]
        %v748 = vld [vmem:[%s357 + $0x1c] sm:$0xf]
        %v749 = vld [vmem:[%s357 + $0x20] sm:$0xf]
        %v750 = vld [vmem:[%s357 + $0x24] sm:$0xf]
        %v751 = vld [vmem:[%s357 + $0x28] sm:$0xf]
        %v752 = vld [vmem:[%s357 + $0x2c] sm:$0xf]
        %v753 = vld [vmem:[%s357 + $0x30] sm:$0xf]
        %v754 = vld [vmem:[%s357 + $0x34] sm:$0xf]
        %v755 = vld [vmem:[%s357 + $0x38] sm:$0xf]
        %v756 = vld [vmem:[%s357 + $0x3c] sm:$0xf]
        %v757 = vlaneseq
        %v758 = vshrl.u32 %v757, 7
        %v759 = vsub.s32 3, %v758
        %v760 = vrot.slane %v376, %v759
        %v777 = vunpack.c.l.b16 %v741
        %v778 = vunpack.c.l.b16 %v742
        %v779 = vunpack.c.l.b16 %v743
        %v780 = vunpack.c.l.b16 %v744
        %v781 = vunpack.c.l.b16 %v745
        %v782 = vunpack.c.l.b16 %v746
        %v783 = vunpack.c.l.b16 %v747
        %v784 = vunpack.c.l.b16 %v748
        %v785 = vunpack.c.l.b16 %v749
        %v786 = vunpack.c.l.b16 %v750
        %v787 = vunpack.c.l.b16 %v751
        %v788 = vunpack.c.l.b16 %v752
        %v789 = vunpack.c.l.b16 %v753
        %v790 = vunpack.c.l.b16 %v754
        %v791 = vunpack.c.l.b16 %v755
        %v792 = vunpack.c.l.b16 %v756
        %v793 = vpack.c.b16 %v778, %v777
        %v794 = vpack.c.b16 %v780, %v779
        %v795 = vpack.c.b16 %v782, %v781
        %v796 = vpack.c.b16 %v784, %v783
        %v797 = vpack.c.b16 %v786, %v785
        %v798 = vpack.c.b16 %v788, %v787
        %v799 = vpack.c.b16 %v790, %v789
        %v800 = vpack.c.b16 %v792, %v791
        %809 = vmatprep.subr.bf16.mxu0 0
        %810 = vmatpush1.bf16.msra.mxu0 %v793
        %811 = vmatprep.subr.bf16.mxu0 0
        %812 = vmatpush1.bf16.msra.mxu0 %v794
        %813 = vmatprep.subr.bf16.mxu0 0
        %814 = vmatpush1.bf16.msra.mxu0 %v795
        %815 = vmatprep.subr.bf16.mxu0 0
        %816 = vmatpush1.bf16.msra.mxu0 %v796
        %817 = vmatprep.subr.bf16.mxu0 0
        %818 = vmatpush1.bf16.msra.mxu0 %v797
        %819 = vmatprep.subr.bf16.mxu0 0
        %820 = vmatpush1.bf16.msra.mxu0 %v798
        %821 = vmatprep.subr.bf16.mxu0 0
        %822 = vmatpush1.bf16.msra.mxu0 %v799
        %823 = vmatprep.subr.bf16.mxu0 0
        %824 = vmatpush1.bf16.msra.mxu0 %v800
        %825 = vmatprep.subr.bf16.mxu0 0
        %826 = vmatpush1.bf16.msra.mxu0 0
        %827 = vmatprep.subr.bf16.mxu0 0
        %828 = vmatpush1.bf16.msra.mxu0 0
        %829 = vmatprep.subr.bf16.mxu0 0
        %830 = vmatpush1.bf16.msra.mxu0 0
        %831 = vmatprep.subr.bf16.mxu0 0
        %832 = vmatpush1.bf16.msra.mxu0 0
        %833 = vmatprep.subr.bf16.mxu0 0
        %834 = vmatpush1.bf16.msra.mxu0 0
        %835 = vmatprep.subr.bf16.mxu0 0
        %836 = vmatpush1.bf16.msra.mxu0 0
        %837 = vmatprep.subr.bf16.mxu0 0
        %838 = vmatpush1.bf16.msra.mxu0 0
        %839 = vmatprep.subr.bf16.mxu0 0
        %840 = vmatpush1.bf16.msra.mxu0 0
        %841 = vmatprep.mubr.bf16.mxu0 0
        %842 = vmatmul.mubr.bf16.gmra.mrb[0].mxu0 %v740
        %v843 = vpop.f32.mrb[0].mxu0
        %v844 = vadd.f32 %v760, %v843
        %v845 = vpop.f32.mrb[0].mxu0
        %v846 = vpop.f32.mrb[0].mxu0
        %v847 = vpop.f32.mrb[0].mxu0
        %848 = vdwg.mxu0
        %v849 = vmul.f32 %v375, %v844
        %v850 = vadd.f32 %v613, %v849
        %v851 = vadd.f32 %v369, %v850
        %852 = vst [vmem:[#allocation2] sm:$0xff] %v851
        // Predicated region
        $region53: #{diffmlp_forward.1} parent=47 // pred_check
          %p853 = pneg %p209
        $region54: #{diffmlp_forward.1} parent=47 // pred_check_branch
          %855 = sbr.rel (%p853) target = $region56
        $region55: #{diffmlp_forward.1} parent=47 // pred_region
          %s857 = ssub.s32 128, 128
          %858 = vsyncadd [#allocation3], %s857
          %s860 = sshll.u32 [#allocation2], 4
          %s861 = int_to_ptr.vmem [resolvable:$true] %s860
          %863 = dma.vmem_to_hbm [thread:$0]  %s861, 128, %s7, [#allocation3]
        $region56: #{diffmlp_forward.1} parent=47 // pred_fallthru
          _
        // Predicated region
        $region57: #{diffmlp_forward.1} parent=47 // pred_check
          %p864 = pneg %p209
        $region58: #{diffmlp_forward.1} parent=47 // pred_check_branch
          %866 = sbr.rel (%p864) target = $region60
        $region59: #{diffmlp_forward.1} parent=47 // pred_region
          %867 = dma.done [#allocation3], 128
        $region60: #{diffmlp_forward.1} parent=47 // pred_fallthru
          _
      $region48: #{diffmlp_forward.1} parent=5 // pred_fallthru
        _
      %p868 = scmp.le.s32.totalorder 2, %s14
      // Predicated region
      $region61: #{diffmlp_forward.1} parent=5 // pred_check
        %p869 = pneg %p868
      $region62: #{diffmlp_forward.1} parent=5 // pred_check_branch
        %871 = sbr.rel (%p869) target = $region64
      $region63: #{diffmlp_forward.1} parent=5 // pred_region
        %s872 = ssub.s32 %s14, 2
      $region64: #{diffmlp_forward.1} parent=5 // pred_fallthru
        _
    $region6: #{diffmlp_forward.1} parent=1 // loop_footer
      %s18 = sadd.s32 1, %s14
    $region7: #{diffmlp_forward.1} parent=1 // loop_footer_branch
      %13 = sbr.rel target = $region3
    $region8: #{diffmlp_forward.1} parent=1 // loop_exit
      _
    %873 = vsyncpa [#allocation3], 1
    %s874 = scalar_lea.sflag [#allocation3], 1
    %875 = vsyncpa %s874, 1

</llo_original>
